<compile_context>
chip_gen: v6e
topology: v6e:2x2x1
jax: 0.10.0
libtpu: 0.0.40
codegen_flags: <defaults>
</compile_context>

<pallas_src>
import functools
import math

import jax
import jax.numpy as jnp
from jax import lax
from jax.experimental import pallas as pl
from jax.experimental.pallas import tpu as pltpu

_LOG_PROB_FLOOR = math.log(1e-5)


def _round_up(x, m):
    return ((x + m - 1) // m) * m


def _cdiv(a, b):
    return -(-a // b)


def _generator_loss_kernel(lamb, inv_b, tb, batch, emd_size, nt_per_core,
                           node_ids_ref, nbr_ids_ref, reward_ref, table_ref,
                           loss_ref):
    c = pl.program_id(0)            # core-split axis ("parallel")
    i = pl.program_id(1)            # batch-tile axis within this split (reduction)
    tile = c * nt_per_core + i
    base = tile * tb

    @pl.when(i == 0)
    def _init():
        loss_ref[...] = jnp.zeros_like(loss_ref)

    n_node = table_ref.shape[1]

    ids_node = node_ids_ref[...]          # (1, tb) int32, lane-dense
    ids_nbr = nbr_ids_ref[...]            # (1, tb) int32

    # ---- vectorized gather on the MXU: one_hot[n, b] = (n == id[b]) ----
    row = lax.broadcasted_iota(jnp.int32, (n_node, tb), 0)
    oh_node = (row == ids_node).astype(jnp.float32)       # (N, tb)
    oh_nbr = (row == ids_nbr).astype(jnp.float32)         # (N, tb)

    # table_ref is the transposed augmented table: rows 0..D-1 = embedding
    # dims, row D = bias.  Gathered tiles come out batch-on-lanes: (D+1, tb).
    ne = jnp.dot(table_ref[...], oh_node, preferred_element_type=jnp.float32)
    nb = jnp.dot(table_ref[...], oh_nbr, preferred_element_type=jnp.float32)

    bias = nb[emd_size:emd_size + 1, :]                    # (1, tb) = bias[nbr]
    score = jnp.sum(ne[:emd_size, :] * nb[:emd_size, :],
                    axis=0, keepdims=True) + bias          # (1, tb)

    # log(clamp(sigmoid(s), 1e-5, 1)) == max(log_sigmoid(s), log(1e-5))
    logp = jnp.minimum(score, 0.0) - jnp.log(1.0 + jnp.exp(-jnp.abs(score)))
    logp = jnp.maximum(logp, _LOG_PROB_FLOOR)

    # Mask columns added when padding the batch up to a multiple of the tile.
    col = base + lax.broadcasted_iota(jnp.int32, (1, tb), 1)
    valid = (col < batch).astype(jnp.float32)              # (1, tb)

    reward = reward_ref[...]                               # (1, tb)
    nll = -jnp.sum(logp * reward * valid, axis=1, keepdims=True)     # (1, 1)
    l2 = 0.5 * jnp.sum(bias * bias * valid, axis=1, keepdims=True)   # (1, 1)

    loss_ref[...] += (inv_b * nll + lamb * l2).reshape(1, 1, 1)


def generator_forward(node_emd_weight, bias_vector, node_ids, neighbor_ids,
                      reward, lamb, *, tile_b=512, core_splits=2):
    n_node, emd_size = node_emd_weight.shape
    batch = int(node_ids.shape[0])

    # Lane-aligned batch tile (multiple of 128), padded batch, core split.
    tb = max(128, min(_round_up(int(tile_b), 128), _round_up(batch, 128)))
    num_tiles = _cdiv(batch, tb)
    cores = max(1, min(int(core_splits), num_tiles))
    nt_per_core = _cdiv(num_tiles, cores)
    b_pad = cores * nt_per_core * tb
    pad = b_pad - batch

    node_ids2d = jnp.pad(node_ids.astype(jnp.int32), (0, pad))[None, :]      # (1, b_pad)
    nbr_ids2d = jnp.pad(neighbor_ids.astype(jnp.int32), (0, pad))[None, :]   # (1, b_pad)
    reward2d = jnp.pad(reward.astype(jnp.float32), (0, pad))[None, :]        # (1, b_pad)

    # Pre-apply the max_norm=1 renorm once (forward-equivalent to PyTorch's
    # per-lookup renorm), then fuse bias_vector in as the last ROW of the
    # transposed table: (D+1, N) — lane-dense in N, no extra VMEM for bias.
    w = node_emd_weight.astype(jnp.float32)
    norm = jnp.sqrt(jnp.sum(w * w, axis=1, keepdims=True))
    w = w * jnp.where(norm > 1.0, 1.0 / (norm + 1e-7), 1.0)
    table_t = jnp.concatenate(
        [w.T, bias_vector.astype(jnp.float32)[None, :]], axis=0)             # (D+1, N)

    # Explicit VMEM budget: resident table + one-hot intermediates + IO blocks.
    table_bytes = _round_up(emd_size + 1, 8) * _round_up(n_node, 128) * 4
    onehot_bytes = 2 * _round_up(n_node, 8) * tb * 4
    io_bytes = 3 * 2 * 8 * tb * 4
    vmem_limit = int(min(max(table_bytes + onehot_bytes + io_bytes + (8 << 20),
                             32 << 20), 100 << 20))

    kernel = functools.partial(_generator_loss_kernel, float(lamb),
                               1.0 / float(batch), tb, batch, emd_size,
                               nt_per_core)

    tile_map = lambda c, i: (0, c * nt_per_core + i)
    grid_spec = pltpu.PrefetchScalarGridSpec(
        num_scalar_prefetch=0,
        grid=(cores, nt_per_core),
        in_specs=[
            pl.BlockSpec((1, tb), tile_map),                 # node ids (lane-dense)
            pl.BlockSpec((1, tb), tile_map),                 # neighbor ids
            pl.BlockSpec((1, tb), tile_map),                 # reward
            # Whole augmented table resident in VMEM once (no block pipelining,
            # no double-buffered duplicate of the table).
            pl.BlockSpec(memory_space=pltpu.MemorySpace.VMEM),
        ],
        out_specs=pl.BlockSpec((1, 1, 1), lambda c, i: (c, 0, 0)),
    )

    partial_losses = pl.pallas_call(
        kernel,
        grid_spec=grid_spec,
        out_shape=jax.ShapeDtypeStruct((cores, 1, 1), jnp.float32),
        compiler_params=pltpu.CompilerParams(
            dimension_semantics=("parallel", "arbitrary"),
            vmem_limit_bytes=vmem_limit,
        ),
    )(node_ids2d, nbr_ids2d, reward2d, table_t)
    return jnp.sum(partial_losses)


def _reference_loss(weight, bias_vec, node_ids, neighbor_ids, reward, lamb):
    """Pure-JAX reference mirroring the PyTorch forward (f32)."""
    def renorm(rows):
        norm = jnp.sqrt(jnp.sum(rows * rows, axis=1, keepdims=True))
        return rows * jnp.where(norm > 1.0, 1.0 / (norm + 1e-7), 1.0)

    ne = renorm(weight[node_ids])
    nb = renorm(weight[neighbor_ids])
    b = bias_vec[neighbor_ids]
    score = jnp.sum(ne * nb, axis=1) + b
    prob = jnp.clip(jax.nn.sigmoid(score), 1e-5, 1.0)
    return -jnp.mean(jnp.log(prob) * reward) + lamb * 0.5 * jnp.sum(b * b)


if __name__ == "__main__":
    key = jax.random.PRNGKey(0)
    k_emb, k_nid, k_nbr, k_rew = jax.random.split(key, 4)

    # Small, deterministic synthetic parameters (shapes from the module's __init__).
    N_NODE, EMD_SIZE, BATCH = 64, 32, 8
    LAMB = 1e-5

    # nn.Embedding default init ~ N(0, 1); bias_vector is zeros in __init__.
    node_emd_weight = jax.random.normal(k_emb, (N_NODE, EMD_SIZE), jnp.float32)
    bias_vector = jnp.zeros((N_NODE,), jnp.float32)

    node_ids = jax.random.randint(k_nid, (BATCH,), 0, N_NODE)
    neighbor_ids = jax.random.randint(k_nbr, (BATCH,), 0, N_NODE)
    reward = jax.random.uniform(k_rew, (BATCH,), jnp.float32)

    loss = generator_forward(node_emd_weight, bias_vector, node_ids,
                             neighbor_ids, reward, LAMB)
    jax.block_until_ready(loss)

    ref = _reference_loss(node_emd_weight, bias_vector, node_ids,
                          neighbor_ids, reward, LAMB)

    assert loss.shape == () and jnp.isfinite(loss)
    # Tolerance allows for the MXU one-hot gather running at reduced matmul
    # precision on some generations; the loss value itself is O(0.3).
    assert jnp.allclose(loss, ref, rtol=5e-3, atol=1e-3), (loss, ref)
    print("KERNEL_OK")
</pallas_src>

<mosaic_0001>
module attributes {stable_mosaic.version = 11 : i64} {
  func.func @_generator_loss_kernel(%arg0: i32, %arg1: i32, %arg2: memref<1x128xi32, #tpu.memory_space<vmem>>, %arg3: memref<1x128xi32, #tpu.memory_space<vmem>>, %arg4: memref<1x128xf32, #tpu.memory_space<vmem>>, %arg5: memref<33x64xf32, #tpu.memory_space<vmem>>, %arg6: memref<1x1x1xf32, #tpu.memory_space<vmem>>) attributes {dimension_semantics = [#tpu.dimension_semantics<parallel>, #tpu.dimension_semantics<arbitrary>], iteration_bounds = array<i64: 1, 1>, scalar_prefetch = 0 : i64, scratch_operands = 0 : i64, tpu.core_type = #tpu.core_type<tc>, window_params = [{transform_indices = @transform_0, window_bounds = array<i64: 1, 128>}, {transform_indices = @transform_1, window_bounds = array<i64: 1, 128>}, {transform_indices = @transform_2, window_bounds = array<i64: 1, 128>}, {pipeline_mode = #tpu.pipeline_mode<synchronous>, transform_indices = @transform_3, window_bounds = array<i64: 33, 64>}, {transform_indices = @transform_4, window_bounds = array<i64: 1, 1, 1>}]} {
    %c1_i32 = arith.constant 1 : i32
    %0 = arith.muli %arg0, %c1_i32 : i32
    %1 = arith.addi %0, %arg1 : i32
    %c128_i32 = arith.constant 128 : i32
    %2 = arith.muli %1, %c128_i32 : i32
    %c0_i32 = arith.constant 0 : i32
    %3 = arith.cmpi eq, %arg1, %c0_i32 : i32
    %4 = arith.extui %3 : i1 to i32
    %c0_i32_0 = arith.constant 0 : i32
    %5 = arith.cmpi ne, %4, %c0_i32_0 : i32
    scf.if %5 {
      %cst_28 = arith.constant 0.000000e+00 : f32
      %69 = vector.broadcast %cst_28 : f32 to vector<1x1x1xf32>
      %c0_29 = arith.constant 0 : index
      %c0_30 = arith.constant 0 : index
      %c0_31 = arith.constant 0 : index
      %70 = vector.load %arg6[%c0_29, %c0_30, %c0_31] : memref<1x1x1xf32, #tpu.memory_space<vmem>>, vector<1x1x1xf32>
      tpu.vector_store %arg6[%c0_29, %c0_30, %c0_31], %69 {strides = array<i32>} : memref<1x1x1xf32, #tpu.memory_space<vmem>>, vector<1x1x1xf32>,
    } else {
    }
    %c0 = arith.constant 0 : index
    %c0_1 = arith.constant 0 : index
    %6 = vector.load %arg2[%c0, %c0_1] : memref<1x128xi32, #tpu.memory_space<vmem>>, vector<1x128xi32>
    %c0_2 = arith.constant 0 : index
    %c0_3 = arith.constant 0 : index
    %7 = vector.load %arg3[%c0_2, %c0_3] : memref<1x128xi32, #tpu.memory_space<vmem>>, vector<1x128xi32>
    %8 = tpu.iota {dimensions = array<i32: 0>} : vector<64x128xi32>
    %9 = vector.broadcast %6 : vector<1x128xi32> to vector<64x128xi32>
    %10 = arith.cmpi eq, %8, %9 : vector<64x128xi32>
    %11 = arith.extui %10 : vector<64x128xi1> to vector<64x128xi32>
    %12 = arith.sitofp %11 : vector<64x128xi32> to vector<64x128xf32>
    %13 = vector.broadcast %7 : vector<1x128xi32> to vector<64x128xi32>
    %14 = arith.cmpi eq, %8, %13 : vector<64x128xi32>
    %15 = arith.extui %14 : vector<64x128xi1> to vector<64x128xi32>
    %16 = arith.sitofp %15 : vector<64x128xi32> to vector<64x128xf32>
    %c0_4 = arith.constant 0 : index
    %c0_5 = arith.constant 0 : index
    %17 = vector.load %arg5[%c0_4, %c0_5] : memref<33x64xf32, #tpu.memory_space<vmem>>, vector<33x64xf32>
    %cst = arith.constant dense<0.000000e+00> : vector<33x128xf32>
    %18 = tpu.matmul %17, %12, %cst {dimension_numbers = #tpu.dot_dimension_numbers<[1], [0], [0], [1], [0, 0, 1, 1], [], []>} : vector<33x64xf32>, vector<64x128xf32>, vector<33x128xf32> -> vector<33x128xf32>
    %c0_6 = arith.constant 0 : index
    %c0_7 = arith.constant 0 : index
    %19 = vector.load %arg5[%c0_6, %c0_7] : memref<33x64xf32, #tpu.memory_space<vmem>>, vector<33x64xf32>
    %cst_8 = arith.constant dense<0.000000e+00> : vector<33x128xf32>
    %20 = tpu.matmul %19, %16, %cst_8 {dimension_numbers = #tpu.dot_dimension_numbers<[1], [0], [0], [1], [0, 0, 1, 1], [], []>} : vector<33x64xf32>, vector<64x128xf32>, vector<33x128xf32> -> vector<33x128xf32>
    %21 = vector.extract_strided_slice %20 {offsets = [32, 0], sizes = [1, 128], strides = [1, 1]} : vector<33x128xf32> to vector<1x128xf32>
    %22 = vector.extract_strided_slice %18 {offsets = [0, 0], sizes = [32, 128], strides = [1, 1]} : vector<33x128xf32> to vector<32x128xf32>
    %23 = vector.extract_strided_slice %20 {offsets = [0, 0], sizes = [32, 128], strides = [1, 1]} : vector<33x128xf32> to vector<32x128xf32>
    %24 = arith.mulf %22, %23 : vector<32x128xf32>
    %cst_9 = arith.constant dense<0.000000e+00> : vector<128xf32>
    %25 = vector.multi_reduction <add>, %24, %cst_9 [0] : vector<32x128xf32> to vector<128xf32>
    %26 = vector.shape_cast %25 : vector<128xf32> to vector<1x128xf32>
    %27 = arith.addf %26, %21 : vector<1x128xf32>
    %cst_10 = arith.constant 0.000000e+00 : f32
    %28 = vector.broadcast %cst_10 : f32 to vector<1x128xf32>
    %29 = arith.minimumf %27, %28 : vector<1x128xf32>
    %30 = math.absf %27 : vector<1x128xf32>
    %cst_11 = arith.constant 0.000000e+00 : f32
    %31 = vector.broadcast %cst_11 : f32 to vector<1x128xf32>
    %32 = arith.subf %31, %30 : vector<1x128xf32>
    %33 = math.exp %32 : vector<1x128xf32>
    %cst_12 = arith.constant 1.000000e+00 : f32
    %34 = vector.broadcast %cst_12 : f32 to vector<1x128xf32>
    %35 = arith.addf %34, %33 : vector<1x128xf32>
    %36 = math.log %35 : vector<1x128xf32>
    %37 = arith.subf %29, %36 : vector<1x128xf32>
    %cst_13 = arith.constant -11.5129251 : f32
    %38 = vector.broadcast %cst_13 : f32 to vector<1x128xf32>
    %39 = arith.maximumf %37, %38 : vector<1x128xf32>
    %40 = tpu.iota {dimensions = array<i32: 1>} : vector<1x128xi32>
    %41 = vector.broadcast %2 : i32 to vector<1x128xi32>
    %42 = arith.addi %41, %40 : vector<1x128xi32>
    %c8_i32 = arith.constant 8 : i32
    %43 = vector.broadcast %c8_i32 : i32 to vector<1x128xi32>
    %44 = arith.cmpi slt, %42, %43 : vector<1x128xi32>
    %45 = arith.extui %44 : vector<1x128xi1> to vector<1x128xi32>
    %46 = arith.sitofp %45 : vector<1x128xi32> to vector<1x128xf32>
    %c0_14 = arith.constant 0 : index
    %c0_15 = arith.constant 0 : index
    %47 = vector.load %arg4[%c0_14, %c0_15] : memref<1x128xf32, #tpu.memory_space<vmem>>, vector<1x128xf32>
    %48 = arith.mulf %39, %47 : vector<1x128xf32>
    %49 = arith.mulf %48, %46 : vector<1x128xf32>
    %cst_16 = arith.constant dense<0.000000e+00> : vector<1xf32>
    %50 = vector.multi_reduction <add>, %49, %cst_16 [1] : vector<1x128xf32> to vector<1xf32>
    %51 = vector.shape_cast %50 : vector<1xf32> to vector<1x1xf32>
    %cst_17 = arith.constant 0.000000e+00 : f32
    %52 = vector.broadcast %cst_17 : f32 to vector<1x1xf32>
    %53 = arith.subf %52, %51 : vector<1x1xf32>
    %54 = arith.mulf %21, %21 : vector<1x128xf32>
    %55 = arith.mulf %54, %46 : vector<1x128xf32>
    %cst_18 = arith.constant dense<0.000000e+00> : vector<1xf32>
    %56 = vector.multi_reduction <add>, %55, %cst_18 [1] : vector<1x128xf32> to vector<1xf32>
    %57 = vector.shape_cast %56 : vector<1xf32> to vector<1x1xf32>
    %cst_19 = arith.constant 5.000000e-01 : f32
    %58 = vector.broadcast %cst_19 : f32 to vector<1x1xf32>
    %59 = arith.mulf %58, %57 : vector<1x1xf32>
    %c0_20 = arith.constant 0 : index
    %c0_21 = arith.constant 0 : index
    %c0_22 = arith.constant 0 : index
    %60 = vector.load %arg6[%c0_20, %c0_21, %c0_22] : memref<1x1x1xf32, #tpu.memory_space<vmem>>, vector<1x1x1xf32>
    %cst_23 = arith.constant 1.250000e-01 : f32
    %61 = vector.broadcast %cst_23 : f32 to vector<1x1xf32>
    %62 = arith.mulf %61, %53 : vector<1x1xf32>
    %cst_24 = arith.constant 9.99999974E-6 : f32
    %63 = vector.broadcast %cst_24 : f32 to vector<1x1xf32>
    %64 = arith.mulf %63, %59 : vector<1x1xf32>
    %65 = arith.addf %62, %64 : vector<1x1xf32>
    %66 = vector.shape_cast %65 : vector<1x1xf32> to vector<1x1x1xf32>
    %67 = arith.addf %60, %66 : vector<1x1x1xf32>
    %c0_25 = arith.constant 0 : index
    %c0_26 = arith.constant 0 : index
    %c0_27 = arith.constant 0 : index
    %68 = vector.load %arg6[%c0_25, %c0_26, %c0_27] : memref<1x1x1xf32, #tpu.memory_space<vmem>>, vector<1x1x1xf32>
    tpu.vector_store %arg6[%c0_25, %c0_26, %c0_27], %67 {strides = array<i32>} : memref<1x1x1xf32, #tpu.memory_space<vmem>>, vector<1x1x1xf32>,
    return
  }
  func.func @transform_0(%arg0: i32, %arg1: i32) -> (i32, i32) {
    %c1_i32 = arith.constant 1 : i32
    %0 = arith.muli %arg0, %c1_i32 : i32
    %1 = arith.addi %0, %arg1 : i32
    %c0_i32 = arith.constant 0 : i32
    %c0_i32_0 = arith.constant 0 : i32
    return %c0_i32, %1 : i32, i32
  }
  func.func @transform_1(%arg0: i32, %arg1: i32) -> (i32, i32) {
    %c1_i32 = arith.constant 1 : i32
    %0 = arith.muli %arg0, %c1_i32 : i32
    %1 = arith.addi %0, %arg1 : i32
    %c0_i32 = arith.constant 0 : i32
    %c0_i32_0 = arith.constant 0 : i32
    return %c0_i32, %1 : i32, i32
  }
  func.func @transform_2(%arg0: i32, %arg1: i32) -> (i32, i32) {
    %c1_i32 = arith.constant 1 : i32
    %0 = arith.muli %arg0, %c1_i32 : i32
    %1 = arith.addi %0, %arg1 : i32
    %c0_i32 = arith.constant 0 : i32
    %c0_i32_0 = arith.constant 0 : i32
    return %c0_i32, %1 : i32, i32
  }
  func.func @transform_3(%arg0: i32, %arg1: i32) -> (i32, i32) {
    %c0_i32 = arith.constant 0 : i32
    %c0_i32_0 = arith.constant 0 : i32
    %c0_i32_1 = arith.constant 0 : i32
    return %c0_i32, %c0_i32_0 : i32, i32
  }
  func.func @transform_4(%arg0: i32, %arg1: i32) -> (i32, i32, i32) {
    %c0_i32 = arith.constant 0 : i32
    %c0_i32_0 = arith.constant 0 : i32
    %c0_i32_1 = arith.constant 0 : i32
    return %arg0, %c0_i32, %c0_i32_0 : i32, i32, i32
  }
}

</mosaic_0001>

<llo_original>
// kernel: tpu_custom_call.1
$region0: #{tpu_custom_call.1}
  #allocation0 [shape = 'u32[]', space=smem, size = 0x4, offset = 0x4, fixed_abs, tag = 'smem constant byte address 0x4 - core index']
  #allocation1 [shape = 'u32[144,128]{1,0:T(1,128)}', space=vmem, size = 0x12000, scoped, tag = 'internal scratch']
  %s0 = inlined_call_operand.hbm [shape: s32[1,128], index: 0, kind: input, shape index: {}]
  %s1 = inlined_call_operand.vmem [shape: s32[1,128], index: 1, kind: input, shape index: {}]
  %s2 = inlined_call_operand.vmem [shape: f32[1,128], index: 2, kind: input, shape index: {}]
  %s3 = inlined_call_operand.hbm [shape: f32[33,64], index: 3, kind: input, shape index: {}]
  %s4 = inlined_call_operand.hbm [shape: f32[1,1,1], index: 4, kind: output, shape index: {}]
  %s5 = sld [smem:[#allocation0]]
  $region38: #{tpu_custom_call.1} parent=0
    _
  %s7 = ssub.s32 1, %s5
  %s8 = scalar_select 0, %s7, %s5
  $region1: #{tpu_custom_call.1} parent=0
    #allocation2 [shape = 'u8[512]{0}', space=vmem, size = 0x400, scoped, tag = 'input window, operand 0, single buffered']
    #allocation3 [shape = 's32[1]{0}', space=sflag, size = 0x4, scoped, tag = 'scoped memory for tpu_custom_call.1']
    #allocation4 [shape = 's32[1]{0}', space=sflag, size = 0x4, scoped, tag = 'scoped memory for tpu_custom_call.1']
    #allocation5 [shape = 'u8[20480]{0}', space=vmem, size = 0x5000, scoped, tag = 'input window, operand 3, single buffered']
    #allocation6 [shape = 's32[1]{0}', space=sflag, size = 0x4, scoped, tag = 'scoped memory for tpu_custom_call.1']
    #allocation7 [shape = 'u8[512]{0}', space=vmem, size = 0x400, scoped, tag = 'output window, operand 0, single buffered']
    %9 = vsyncpa [#allocation3], 0
    %10 = vsyncpa [#allocation6], 0
    %11 = vsyncpa [#allocation4], 0
    // Predicated region
    $region2: #{tpu_custom_call.1} parent=1 // pred_check
      _
    $region3: #{tpu_custom_call.1} parent=1 // pred_check_branch
      %13 = sbr.rel (0) target = $region5
    $region4: #{tpu_custom_call.1} parent=1 // pred_region
      %s14 = sadd.s32 0, 0
      %s16 = ssub.s32 16, 16
      %17 = vsyncadd [#allocation3], %s16
      %s18 = smul.addr %s14, 16
      %s19 = scalar_lea.hbm %s0, %s18
      %s21 = sshll.u32 [#allocation2], 4
      %s22 = int_to_ptr.vmem [resolvable:$true] %s21
      %24 = dma.hbm_to_vmem [thread:$0]  %s19, 16, %s22, [#allocation3]
    $region5: #{tpu_custom_call.1} parent=1 // pred_fallthru
      _
    // Predicated region
    $region6: #{tpu_custom_call.1} parent=1 // pred_check
      _
    $region7: #{tpu_custom_call.1} parent=1 // pred_check_branch
      %26 = sbr.rel (0) target = $region9
    $region8: #{tpu_custom_call.1} parent=1 // pred_region
      %s27 = sadd.s32 0, 0
      %p28 = scmp.lt.s32.totalorder %s27, 0
      %s29 = scalar_select %p28, %s27, 0
      %s30 = scalar_lea.vmem %s1, %s29
      %s31 = sadd.s32 0, 0
    $region9: #{tpu_custom_call.1} parent=1 // pred_fallthru
      _
    // Predicated region
    $region10: #{tpu_custom_call.1} parent=1 // pred_check
      _
    $region11: #{tpu_custom_call.1} parent=1 // pred_check_branch
      %33 = sbr.rel (0) target = $region13
    $region12: #{tpu_custom_call.1} parent=1 // pred_region
      %s34 = sadd.s32 0, 0
      %p35 = scmp.lt.s32.totalorder %s34, 0
      %s36 = scalar_select %p35, %s34, 0
      %s37 = scalar_lea.vmem %s2, %s36
      %s38 = sadd.s32 0, 0
    $region13: #{tpu_custom_call.1} parent=1 // pred_fallthru
      _
    // Predicated region
    $region14: #{tpu_custom_call.1} parent=1 // pred_check
      _
    $region15: #{tpu_custom_call.1} parent=1 // pred_check_branch
      %40 = sbr.rel (0) target = $region17
    $region16: #{tpu_custom_call.1} parent=1 // pred_region
      %s42 = ssub.s32 640, 640
      %43 = vsyncadd [#allocation6], %s42
      %s44 = sshll.u32 [#allocation5], 4
      %s45 = int_to_ptr.vmem [resolvable:$true] %s44
      %50 = dma.hbm_to_vmem [thread:$0]  %s3, 640, %s45, [#allocation6], 128, 128, 8
    $region17: #{tpu_custom_call.1} parent=1 // pred_fallthru
      _
    // Predicated region
    $region18: #{tpu_custom_call.1} parent=1 // pred_check
      _
    $region19: #{tpu_custom_call.1} parent=1 // pred_check_branch
      %52 = sbr.rel (0) target = $region21
    $region20: #{tpu_custom_call.1} parent=1 // pred_region
      %53 = dma.done [#allocation3], 16
    $region21: #{tpu_custom_call.1} parent=1 // pred_fallthru
      _
    // Predicated region
    $region22: #{tpu_custom_call.1} parent=1 // pred_check
      _
    $region23: #{tpu_custom_call.1} parent=1 // pred_check_branch
      %55 = sbr.rel (0) target = $region25
    $region24: #{tpu_custom_call.1} parent=1 // pred_region
      %56 = dma.done [#allocation6], 640
    $region25: #{tpu_custom_call.1} parent=1 // pred_fallthru
      _
    %s57 = sadd.s32 0, 0
    %p58 = scmp.lt.s32.totalorder %s57, 0
    %s59 = scalar_select %p58, %s57, 0
    %s60 = scalar_lea.vmem %s1, %s59
    %s61 = sadd.s32 0, 0
    %p62 = scmp.lt.s32.totalorder %s61, 0
    %s63 = scalar_select %p62, %s61, 0
    %s64 = scalar_lea.vmem %s2, %s63
    %s65 = sadd.s32 0, 0
    %s66 = sadd.s32 0, 0
    %p67 = scmp.lt.s32.totalorder %s66, 0
    %s68 = scalar_select %p67, %s66, 0
    %s69 = scalar_lea.vmem %s1, %s68
    %s70 = sadd.s32 0, 0
    %s71 = sadd.s32 0, 0
    %p72 = scmp.lt.s32.totalorder %s71, 0
    %s73 = scalar_select %p72, %s71, 0
    %s74 = scalar_lea.vmem %s2, %s73
    %s75 = sadd.s32 0, 0
    %s76 = sadd.s32 0, 0
    %s77 = smul.u32 %s76, 128
    %p78 = scmp.eq.s32.totalorder 0, 0
    // Predicated region
    $region26: #{tpu_custom_call.1} parent=1 // pred_check
      %p79 = pneg %p78
    $region27: #{tpu_custom_call.1} parent=1 // pred_check_branch
      %81 = sbr.rel (%p79) target = $region29
    $region28: #{tpu_custom_call.1} parent=1 // pred_region
      %vm82 = vcmask 0
      %83 = vst.msk [vmem:[#allocation7] sm:$0x1] %vm82, 0.0
    $region29: #{tpu_custom_call.1} parent=1 // pred_fallthru
      _
    %v84 = vld [vmem:[#allocation2] sm:$0x1]
    %v85 = vld [vmem:[%s69] sm:$0x1]
    %v86 = vlaneseq
    %v87 = vshrl.u32 %v86, 7
    %v88 = vadd.s32 %v87, 8
    %v89 = vadd.s32 %v87, 16
    %v90 = vadd.s32 %v87, 24
    %v91 = vadd.s32 %v87, 32
    %v92 = vadd.s32 %v87, 40
    %v93 = vadd.s32 %v87, 48
    %v94 = vadd.s32 %v87, 56
    %v95 = vlaneseq
    %v96 = vshrl.u32 %v95, 7
    %v97 = vsub.s32 0, %v96
    %v98 = vrot.slane %v84, %v97
    %vm99 = vcmp.eq.s32.totalorder %v87, %v98
    %vm100 = vcmp.eq.s32.totalorder %v88, %v98
    %vm101 = vcmp.eq.s32.totalorder %v89, %v98
    %vm102 = vcmp.eq.s32.totalorder %v90, %v98
    %vm103 = vcmp.eq.s32.totalorder %v91, %v98
    %vm104 = vcmp.eq.s32.totalorder %v92, %v98
    %vm105 = vcmp.eq.s32.totalorder %v93, %v98
    %vm106 = vcmp.eq.s32.totalorder %v94, %v98
    %v107 = vsel %vm99, 1, 0
    %v108 = vsel %vm100, 1, 0
    %v109 = vsel %vm101, 1, 0
    %v110 = vsel %vm102, 1, 0
    %v111 = vsel %vm103, 1, 0
    %v112 = vsel %vm104, 1, 0
    %v113 = vsel %vm105, 1, 0
    %v114 = vsel %vm106, 1, 0
    %v115 = vcvt.s32.f32 %v107
    %v116 = vcvt.s32.f32 %v108
    %v117 = vcvt.s32.f32 %v109
    %v118 = vcvt.s32.f32 %v110
    %v119 = vcvt.s32.f32 %v111
    %v120 = vcvt.s32.f32 %v112
    %v121 = vcvt.s32.f32 %v113
    %v122 = vcvt.s32.f32 %v114
    %v123 = vlaneseq
    %v124 = vshrl.u32 %v123, 7
    %v125 = vsub.s32 0, %v124
    %v126 = vrot.slane %v85, %v125
    %vm127 = vcmp.eq.s32.totalorder %v87, %v126
    %vm128 = vcmp.eq.s32.totalorder %v88, %v126
    %vm129 = vcmp.eq.s32.totalorder %v89, %v126
    %vm130 = vcmp.eq.s32.totalorder %v90, %v126
    %vm131 = vcmp.eq.s32.totalorder %v91, %v126
    %vm132 = vcmp.eq.s32.totalorder %v92, %v126
    %vm133 = vcmp.eq.s32.totalorder %v93, %v126
    %vm134 = vcmp.eq.s32.totalorder %v94, %v126
    %v135 = vsel %vm127, 1, 0
    %v136 = vsel %vm128, 1, 0
    %v137 = vsel %vm129, 1, 0
    %v138 = vsel %vm130, 1, 0
    %v139 = vsel %vm131, 1, 0
    %v140 = vsel %vm132, 1, 0
    %v141 = vsel %vm133, 1, 0
    %v142 = vsel %vm134, 1, 0
    %v143 = vcvt.s32.f32 %v135
    %v144 = vcvt.s32.f32 %v136
    %v145 = vcvt.s32.f32 %v137
    %v146 = vcvt.s32.f32 %v138
    %v147 = vcvt.s32.f32 %v139
    %v148 = vcvt.s32.f32 %v140
    %v149 = vcvt.s32.f32 %v141
    %v150 = vcvt.s32.f32 %v142
    %v151 = vld [vmem:[#allocation5] sm:$0xff]
    %v152 = vld [vmem:[#allocation5 + $0x8] sm:$0xff]
    %v153 = vld [vmem:[#allocation5 + $0x10] sm:$0xff]
    %v154 = vld [vmem:[#allocation5 + $0x18] sm:$0xff]
    %v155 = vld [vmem:[#allocation5 + $0x20] sm:$0x1]
    %vm156 = vcmask 523264
    %v158 = vsel %vm156, %v151, 0
    %v161 = vsel %vm156, %v152, 0
    %v164 = vsel %vm156, %v153, 0
    %v167 = vsel %vm156, %v154, 0
    %v170 = vsel %vm156, %v155, 0
    %172 = vmatprep.subr.mxu0 0.0
    %173 = vmatpush1.msra.mxu0 0.0
    %174 = vmatprep.subr.mxu0 0.0
    %175 = vmatpush1.msra.mxu0 0.0
    %176 = vmatprep.subr.mxu0 0.0
    %177 = vmatpush1.msra.mxu0 0.0
    %178 = vmatprep.subr.mxu0 0.0
    %179 = vmatpush1.msra.mxu0 0.0
    %180 = vmatprep.subr.mxu0 0.0
    %181 = vmatpush1.msra.mxu0 0.0
    %182 = vmatprep.subr.mxu0 0.0
    %183 = vmatpush1.msra.mxu0 0.0
    %184 = vmatprep.subr.mxu0 0.0
    %185 = vmatpush1.msra.mxu0 0.0
    %186 = vmatprep.subr.mxu0 0.0
    %187 = vmatpush1.msra.mxu0 0.0
    %188 = vmatprep.subr.mxu0 0.0
    %189 = vmatpush1.msra.mxu0 %v122
    %190 = vmatprep.subr.mxu0 0.0
    %191 = vmatpush1.msra.mxu0 %v121
    %192 = vmatprep.subr.mxu0 0.0
    %193 = vmatpush1.msra.mxu0 %v120
    %194 = vmatprep.subr.mxu0 0.0
    %195 = vmatpush1.msra.mxu0 %v119
    %196 = vmatprep.subr.mxu0 0.0
    %197 = vmatpush1.msra.mxu0 %v118
    %198 = vmatprep.subr.mxu0 0.0
    %199 = vmatpush1.msra.mxu0 %v117
    %200 = vmatprep.subr.mxu0 0.0
    %201 = vmatpush1.msra.mxu0 %v116
    %202 = vmatprep.subr.mxu0 0.0
    %203 = vmatpush1.msra.mxu0 %v115
    %204 = vmatprep.subr.mxu0 0.0
    %205 = vmatpush2.msra.mxu0 0.0
    %206 = vmatprep.subr.mxu0 0.0
    %207 = vmatpush2.msra.mxu0 0.0
    %208 = vmatprep.subr.mxu0 0.0
    %209 = vmatpush2.msra.mxu0 0.0
    %210 = vmatprep.subr.mxu0 0.0
    %211 = vmatpush2.msra.mxu0 0.0
    %212 = vmatprep.subr.mxu0 0.0
    %213 = vmatpush2.msra.mxu0 0.0
    %214 = vmatprep.subr.mxu0 0.0
    %215 = vmatpush2.msra.mxu0 0.0
    %216 = vmatprep.subr.mxu0 0.0
    %217 = vmatpush2.msra.mxu0 0.0
    %218 = vmatprep.subr.mxu0 0.0
    %219 = vmatpush2.msra.mxu0 0.0
    %220 = vmatprep.subr.mxu0 0.0
    %221 = vmatpush2.msra.mxu0 0.0
    %222 = vmatprep.subr.mxu0 0.0
    %223 = vmatpush2.msra.mxu0 0.0
    %224 = vmatprep.subr.mxu0 0.0
    %225 = vmatpush2.msra.mxu0 0.0
    %226 = vmatprep.subr.mxu0 0.0
    %227 = vmatpush2.msra.mxu0 0.0
    %228 = vmatprep.subr.mxu0 0.0
    %229 = vmatpush2.msra.mxu0 0.0
    %230 = vmatprep.subr.mxu0 0.0
    %231 = vmatpush2.msra.mxu0 0.0
    %232 = vmatprep.subr.mxu0 0.0
    %233 = vmatpush2.msra.mxu0 0.0
    %234 = vmatprep.subr.mxu0 0.0
    %235 = vmatpush2.msra.mxu0 0.0
    %236 = vmatprep.mubr.f32.mxu0 0.0
    %237 = vmatmul.mubr.f32.gmra.mxu0 %v158
    %v238 = vpop.f32.mrf.mxu0
    %v239 = vadd.f32 0.0, %v238
    %v240 = vpop.f32.mrf.mxu0
    %241 = vmatprep.mubr.f32.mxu0 0.0
    %242 = vmatmul.mubr.f32.gmra.mxu0 %v161
    %v243 = vpop.f32.mrf.mxu0
    %v244 = vadd.f32 0.0, %v243
    %v245 = vpop.f32.mrf.mxu0
    %246 = vmatprep.mubr.f32.mxu0 0.0
    %247 = vmatmul.mubr.f32.gmra.mxu0 %v164
    %v248 = vpop.f32.mrf.mxu0
    %v249 = vadd.f32 0.0, %v248
    %v250 = vpop.f32.mrf.mxu0
    %251 = vmatprep.mubr.f32.mxu0 0.0
    %252 = vmatmul.mubr.f32.gmra.mxu0 %v167
    %v253 = vpop.f32.mrf.mxu0
    %v254 = vadd.f32 0.0, %v253
    %v255 = vpop.f32.mrf.mxu0
    %256 = vmatprep.mubr.f32.mxu0 0.0
    %257 = vmatmul.mubr.f32.gmra.mxu0 %v170
    %v258 = vpop.f32.mrf.mxu0
    %v259 = vpop.f32.mrf.mxu0
    %260 = vdwg.mxu0
    %261 = vmatprep.subr.mxu0 0.0
    %262 = vmatpush1.msra.mxu0 0.0
    %263 = vmatprep.subr.mxu0 0.0
    %264 = vmatpush1.msra.mxu0 0.0
    %265 = vmatprep.subr.mxu0 0.0
    %266 = vmatpush1.msra.mxu0 0.0
    %267 = vmatprep.subr.mxu0 0.0
    %268 = vmatpush1.msra.mxu0 0.0
    %269 = vmatprep.subr.mxu0 0.0
    %270 = vmatpush1.msra.mxu0 0.0
    %271 = vmatprep.subr.mxu0 0.0
    %272 = vmatpush1.msra.mxu0 0.0
    %273 = vmatprep.subr.mxu0 0.0
    %274 = vmatpush1.msra.mxu0 0.0
    %275 = vmatprep.subr.mxu0 0.0
    %276 = vmatpush1.msra.mxu0 0.0
    %277 = vmatprep.subr.mxu0 0.0
    %278 = vmatpush1.msra.mxu0 %v150
    %279 = vmatprep.subr.mxu0 0.0
    %280 = vmatpush1.msra.mxu0 %v149
    %281 = vmatprep.subr.mxu0 0.0
    %282 = vmatpush1.msra.mxu0 %v148
    %283 = vmatprep.subr.mxu0 0.0
    %284 = vmatpush1.msra.mxu0 %v147
    %285 = vmatprep.subr.mxu0 0.0
    %286 = vmatpush1.msra.mxu0 %v146
    %287 = vmatprep.subr.mxu0 0.0
    %288 = vmatpush1.msra.mxu0 %v145
    %289 = vmatprep.subr.mxu0 0.0
    %290 = vmatpush1.msra.mxu0 %v144
    %291 = vmatprep.subr.mxu0 0.0
    %292 = vmatpush1.msra.mxu0 %v143
    %293 = vmatprep.subr.mxu0 0.0
    %294 = vmatpush2.msra.mxu0 0.0
    %295 = vmatprep.subr.mxu0 0.0
    %296 = vmatpush2.msra.mxu0 0.0
    %297 = vmatprep.subr.mxu0 0.0
    %298 = vmatpush2.msra.mxu0 0.0
    %299 = vmatprep.subr.mxu0 0.0
    %300 = vmatpush2.msra.mxu0 0.0
    %301 = vmatprep.subr.mxu0 0.0
    %302 = vmatpush2.msra.mxu0 0.0
    %303 = vmatprep.subr.mxu0 0.0
    %304 = vmatpush2.msra.mxu0 0.0
    %305 = vmatprep.subr.mxu0 0.0
    %306 = vmatpush2.msra.mxu0 0.0
    %307 = vmatprep.subr.mxu0 0.0
    %308 = vmatpush2.msra.mxu0 0.0
    %309 = vmatprep.subr.mxu0 0.0
    %310 = vmatpush2.msra.mxu0 0.0
    %311 = vmatprep.subr.mxu0 0.0
    %312 = vmatpush2.msra.mxu0 0.0
    %313 = vmatprep.subr.mxu0 0.0
    %314 = vmatpush2.msra.mxu0 0.0
    %315 = vmatprep.subr.mxu0 0.0
    %316 = vmatpush2.msra.mxu0 0.0
    %317 = vmatprep.subr.mxu0 0.0
    %318 = vmatpush2.msra.mxu0 0.0
    %319 = vmatprep.subr.mxu0 0.0
    %320 = vmatpush2.msra.mxu0 0.0
    %321 = vmatprep.subr.mxu0 0.0
    %322 = vmatpush2.msra.mxu0 0.0
    %323 = vmatprep.subr.mxu0 0.0
    %324 = vmatpush2.msra.mxu0 0.0
    %325 = vmatprep.mubr.f32.mxu0 0.0
    %326 = vmatmul.mubr.f32.gmra.mxu0 %v158
    %v327 = vpop.f32.mrf.mxu0
    %v328 = vadd.f32 0.0, %v327
    %v329 = vpop.f32.mrf.mxu0
    %330 = vmatprep.mubr.f32.mxu0 0.0
    %331 = vmatmul.mubr.f32.gmra.mxu0 %v161
    %v332 = vpop.f32.mrf.mxu0
    %v333 = vadd.f32 0.0, %v332
    %v334 = vpop.f32.mrf.mxu0
    %335 = vmatprep.mubr.f32.mxu0 0.0
    %336 = vmatmul.mubr.f32.gmra.mxu0 %v164
    %v337 = vpop.f32.mrf.mxu0
    %v338 = vadd.f32 0.0, %v337
    %v339 = vpop.f32.mrf.mxu0
    %340 = vmatprep.mubr.f32.mxu0 0.0
    %341 = vmatmul.mubr.f32.gmra.mxu0 %v167
    %v342 = vpop.f32.mrf.mxu0
    %v343 = vadd.f32 0.0, %v342
    %v344 = vpop.f32.mrf.mxu0
    %345 = vmatprep.mubr.f32.mxu0 0.0
    %346 = vmatmul.mubr.f32.gmra.mxu0 %v170
    %v347 = vpop.f32.mrf.mxu0
    %v348 = vadd.f32 0.0, %v347
    %v349 = vpop.f32.mrf.mxu0
    %350 = vdwg.mxu0
    %v351 = vmul.f32 %v239, %v328
    %v352 = vmul.f32 %v244, %v333
    %v353 = vmul.f32 %v249, %v338
    %v354 = vmul.f32 %v254, %v343
    %v355 = vadd.f32 %v351, %v352
    %v356 = vadd.f32 %v355, %v353
    %v357 = vadd.f32 %v356, %v354
    %v358 = vrot.slane %v357, 4
    %v359 = vadd.f32 %v357, %v358
    %v360 = vrot.slane %v359, 2
    %v361 = vadd.f32 %v359, %v360
    %v362 = vrot.slane %v361, 1
    %v363 = vadd.f32 %v361, %v362
    %v364 = vadd.f32 %v363, %v348
    %v365 = vmin.f32 %v364, 0.0
    %v366 = vand.u32 2147483647, %v364
    %v367 = vsub.f32 0.0, %v366
    %v368 = vmul.f32 %v367, 1.442695
    %v369 = vpow.pop %v368
    %v370 = vadd.f32 %v369, 1.0
    %v371 = vlog2.pop %v370
    %v372 = vmul.f32 %v371, 0.6931472
    %v373 = vsub.f32 %v365, %v372
    %v374 = vmax.f32 %v373, -11.512925
    %v375 = vlaneseq
    %v376 = vand.u32 %v375, 127
    %v377 = vstv %s77
    %v378 = vadd.s32 %v377, %v376
    %vm379 = vcmp.lt.s32.totalorder %v378, 8
    %v380 = vsel %vm379, 1, 0
    %v381 = vcvt.s32.f32 %v380
    %v382 = vld [vmem:[%s74] sm:$0x1]
    %v383 = vmul.f32 %v374, %v382
    %v384 = vmul.f32 %v383, %v381
    %vm385 = vcmask 1040384
    %v386 = vsel %vm385, %v384, 0.0
    %387 = vadd.xlane.f32.xlu0 %v386
    %v388 = vpop.xlane.xlu0 %387
    %v389 = vsub.f32 0.0, %v388
    %v390 = vmul.f32 %v348, %v348
    %v391 = vmul.f32 %v390, %v381
    %v392 = vsel %vm385, %v391, 0.0
    %393 = vadd.xlane.f32.xlu0 %v392
    %v394 = vpop.xlane.xlu0 %393
    %v395 = vmul.f32 %v394, 0.5
    %v396 = vld [vmem:[#allocation7] sm:$0x1]
    %v397 = vmul.f32 %v389, 0.125
    %v398 = vmul.f32 %v395, 1e-05
    %v399 = vadd.f32 %v397, %v398
    %v400 = vadd.f32 %v396, %v399
    %vm401 = vcmask 0
    %402 = vst.msk [vmem:[#allocation7] sm:$0x1] %vm401, %v400
    // Predicated region
    $region30: #{tpu_custom_call.1} parent=1 // pred_check
      _
    $region31: #{tpu_custom_call.1} parent=1 // pred_check_branch
      %404 = sbr.rel (0) target = $region33
    $region32: #{tpu_custom_call.1} parent=1 // pred_region
      %s406 = ssub.s32 16, 16
      %407 = vsyncadd [#allocation4], %s406
      %s409 = sshll.u32 [#allocation7], 4
      %s410 = int_to_ptr.vmem [resolvable:$true] %s409
      %412 = dma.vmem_to_hbm [thread:$0]  %s410, 16, %s4, [#allocation4]
    $region33: #{tpu_custom_call.1} parent=1 // pred_fallthru
      _
    // Predicated region
    $region34: #{tpu_custom_call.1} parent=1 // pred_check
      _
    $region35: #{tpu_custom_call.1} parent=1 // pred_check_branch
      %414 = sbr.rel (0) target = $region37
    $region36: #{tpu_custom_call.1} parent=1 // pred_region
      %415 = dma.done [#allocation4], 16
    $region37: #{tpu_custom_call.1} parent=1 // pred_fallthru
      _
    %416 = vsyncpa [#allocation3], 1
    %417 = vsyncpa [#allocation6], 1
    %418 = vsyncpa [#allocation4], 1

</llo_original>
